<compile_context>
chip_gen: v7x
topology: tpu7x:2x2x1
jax: 0.10.0
libtpu: 0.0.40
codegen_flags: <defaults>
</compile_context>

<pallas_src>
import functools

import jax
import jax.numpy as jnp
from jax.experimental import pallas as pl
from jax.experimental.pallas import tpu as pltpu


NEG_INF = -1e30     # sentinel logit for padded atoms
ATOM_PAD = 128      # pad atom dim to one full lane-vreg


def _round_up(x, m):
    return (x + m - 1) // m * m


# ----------------------------------------------------------------------------
# Pallas kernel: feature MLP + dueling value/advantage streams + softmax
# ----------------------------------------------------------------------------
def rainbow_kernel(x_ref, w1_ref, b1_ref, wva_ref, bva_ref,
                   wv2_ref, bv2_ref, wa2_ref, ba2_ref,
                   dist_ref, *, action_dim, atom_pad, hidden):
    x = x_ref[...]                                                     # (TB, D_in)

    # feature = ReLU(NoisyLinear(x))
    feat = jnp.maximum(
        jnp.dot(x, w1_ref[...], preferred_element_type=jnp.float32) + b1_ref[...],
        0.0)                                                           # (TB, H)

    # fused value/advantage hidden: one (H, 2H) matmul, then free 128-aligned slices
    hva = jnp.maximum(
        jnp.dot(feat, wva_ref[...], preferred_element_type=jnp.float32) + bva_ref[...],
        0.0)                                                           # (TB, 2H)
    vh = hva[:, :hidden]
    ah = hva[:, hidden:]

    # value head (atoms padded to atom_pad; padded lanes get NEG_INF from bv2 padding)
    value = jnp.dot(vh, wv2_ref[...], preferred_element_type=jnp.float32) + bv2_ref[...]   # (TB, atom_pad)

    # all A advantage heads fused into one (H, A*atom_pad) matmul
    adv = jnp.dot(ah, wa2_ref[...], preferred_element_type=jnp.float32) + ba2_ref[...]     # (TB, A*atom_pad)

    # mean over actions at each atom (padded lanes are exactly 0 in adv)
    adv_mean = adv[:, 0:atom_pad]
    for a in range(1, action_dim):
        adv_mean = adv_mean + adv[:, a * atom_pad:(a + 1) * atom_pad]
    adv_mean = adv_mean * (1.0 / action_dim)                           # (TB, atom_pad)

    vm = value - adv_mean                                              # padded lanes ~ -1e30

    # dueling combine + numerically-stable softmax per action (all slices/stores
    # are vreg-aligned and unmasked: atom_pad == 128)
    for a in range(action_dim):
        q = vm + adv[:, a * atom_pad:(a + 1) * atom_pad]               # (TB, atom_pad)
        q_max = jnp.max(q, axis=-1, keepdims=True)
        e = jnp.exp(q - q_max)                                         # padded lanes -> 0
        inv = pl.reciprocal(jnp.sum(e, axis=-1, keepdims=True))
        dist_ref[:, a * atom_pad:(a + 1) * atom_pad] = e * inv


# ----------------------------------------------------------------------------
# Deterministic NoisyLinear parameter construction (factorized Gaussian noise)
# ----------------------------------------------------------------------------
def noisy_linear_params(key, in_f, out_f, std_init=0.5):
    k1, k2, k3, k4 = jax.random.split(key, 4)
    mu_range = 1.0 / jnp.sqrt(jnp.float32(in_f))
    w_mu = jax.random.uniform(k1, (out_f, in_f), jnp.float32, -mu_range, mu_range)
    b_mu = jax.random.uniform(k2, (out_f,), jnp.float32, -mu_range, mu_range)
    w_sigma = jnp.full((out_f, in_f), std_init / jnp.sqrt(jnp.float32(in_f)), jnp.float32)
    b_sigma = jnp.full((out_f,), std_init / jnp.sqrt(jnp.float32(out_f)), jnp.float32)

    def f(v):
        return jnp.sign(v) * jnp.sqrt(jnp.abs(v))

    eps_in = f(jax.random.normal(k3, (in_f,), jnp.float32))
    eps_out = f(jax.random.normal(k4, (out_f,), jnp.float32))
    W = w_mu + w_sigma * jnp.outer(eps_out, eps_in)   # (out, in) -- PyTorch convention
    b = b_mu + b_sigma * eps_out                      # (out,)
    return W, b


def make_raw_params(key, input_dim, hidden, action_dim, atom_size):
    keys = jax.random.split(key, 5)
    W1, b1 = noisy_linear_params(keys[0], input_dim, hidden)
    Wv1, bv1 = noisy_linear_params(keys[1], hidden, hidden)
    Wv2, bv2 = noisy_linear_params(keys[2], hidden, atom_size)
    Wa1, ba1 = noisy_linear_params(keys[3], hidden, hidden)
    Wa2, ba2 = noisy_linear_params(keys[4], hidden, action_dim * atom_size)
    return dict(W1=W1, b1=b1, Wv1=Wv1, bv1=bv1, Wv2=Wv2, bv2=bv2,
                Wa1=Wa1, ba1=ba1, Wa2=Wa2, ba2=ba2)


# ----------------------------------------------------------------------------
# Kernel-layout packing: transpose, fuse, and pad atoms to ATOM_PAD
# ----------------------------------------------------------------------------
def pack_params(raw, action_dim, atom_size, atom_pad=ATOM_PAD):
    hidden = raw["W1"].shape[0]

    w1 = raw["W1"].T                                                   # (D_in, H)
    b1 = raw["b1"][None, :]                                            # (1, H)

    # fused value/advantage hidden layer: (H, 2H), (1, 2H)
    wva = jnp.concatenate([raw["Wv1"].T, raw["Wa1"].T], axis=1)
    bva = jnp.concatenate([raw["bv1"], raw["ba1"]])[None, :]

    # value head padded to atom_pad; padded logits forced to NEG_INF via the bias
    wv2 = jnp.zeros((hidden, atom_pad), jnp.float32).at[:, :atom_size].set(raw["Wv2"].T)
    bv2 = jnp.full((atom_pad,), NEG_INF, jnp.float32).at[:atom_size].set(raw["bv2"])[None, :]

    # advantage head: (A*atom, H) -> (A, atom_pad, H) zero-padded -> flat (H, A*atom_pad)
    Wa2r = raw["Wa2"].reshape(action_dim, atom_size, hidden)
    wa2 = jnp.zeros((action_dim, atom_pad, hidden), jnp.float32).at[:, :atom_size, :].set(Wa2r)
    wa2 = jnp.transpose(wa2, (2, 0, 1)).reshape(hidden, action_dim * atom_pad)
    ba2 = (jnp.zeros((action_dim, atom_pad), jnp.float32)
           .at[:, :atom_size].set(raw["ba2"].reshape(action_dim, atom_size))
           .reshape(1, action_dim * atom_pad))

    return dict(w1=w1, b1=b1, wva=wva, bva=bva, wv2=wv2, bv2=bv2, wa2=wa2, ba2=ba2)


# ----------------------------------------------------------------------------
# Wrapper: batch-tiled pallas_call, lane-dense output slab
# ----------------------------------------------------------------------------
def rainbow_forward(x, params, action_dim, atom_size, tile_b=None):
    batch, input_dim = x.shape
    hidden = params["w1"].shape[1]
    atom_pad = params["wv2"].shape[1]

    if tile_b is None:
        tile_b = min(128, _round_up(max(batch, 1), 8))
    assert tile_b % 8 == 0
    padded_b = _round_up(batch, tile_b)
    if padded_b != batch:
        x = jnp.pad(x, ((0, padded_b - batch), (0, 0)))

    weights = (params["w1"], params["b1"], params["wva"], params["bva"],
               params["wv2"], params["bv2"], params["wa2"], params["ba2"])

    def _resident(arr):   # full array, same block every grid step -> stays in VMEM
        return pl.BlockSpec(arr.shape, lambda i: (0, 0))

    kernel = functools.partial(rainbow_kernel, action_dim=action_dim,
                               atom_pad=atom_pad, hidden=hidden)

    dist_flat = pl.pallas_call(
        kernel,
        out_shape=jax.ShapeDtypeStruct((padded_b, action_dim * atom_pad), jnp.float32),
        grid=(padded_b // tile_b,),
        in_specs=[pl.BlockSpec((tile_b, input_dim), lambda i: (i, 0))]
                 + [_resident(w) for w in weights],
        out_specs=pl.BlockSpec((tile_b, action_dim * atom_pad), lambda i: (i, 0)),
        compiler_params=pltpu.CompilerParams(dimension_semantics=("parallel",)),
    )(x, *weights)

    # lane-dense slab -> (B, A, atom) in plain JAX
    dist = dist_flat[:batch].reshape(batch, action_dim, atom_pad)[:, :, :atom_size]
    return dist


# Pure-JAX reference (mirrors the PyTorch forward exactly, on raw params).
def rainbow_reference(x, raw, action_dim, atom_size):
    feat = jax.nn.relu(x @ raw["W1"].T + raw["b1"])
    vh = jax.nn.relu(feat @ raw["Wv1"].T + raw["bv1"])
    value = (vh @ raw["Wv2"].T + raw["bv2"]).reshape(-1, 1, atom_size)
    ah = jax.nn.relu(feat @ raw["Wa1"].T + raw["ba1"])
    adv = (ah @ raw["Wa2"].T + raw["ba2"]).reshape(-1, action_dim, atom_size)
    q = value + adv - adv.mean(axis=1, keepdims=True)
    return jax.nn.softmax(q, axis=-1)


if __name__ == "__main__":
    # Small shapes consistent with the module: flat state input, hidden=[128].
    input_dim, hidden, action_dim, atom_size = 16, 128, 4, 51

    key = jax.random.PRNGKey(0)
    kx1, kx2, kp = jax.random.split(key, 3)
    raw = make_raw_params(kp, input_dim, hidden, action_dim, atom_size)
    params = pack_params(raw, action_dim, atom_size)

    # (1) small batch, single grid step
    x1 = jax.random.normal(kx1, (8, input_dim), jnp.float32)
    d1 = jax.block_until_ready(rainbow_forward(x1, params, action_dim, atom_size))
    r1 = rainbow_reference(x1, raw, action_dim, atom_size)
    assert d1.shape == (8, action_dim, atom_size)
    assert jnp.allclose(jnp.sum(d1, axis=-1), 1.0, atol=1e-5)
    assert jnp.allclose(d1, r1, atol=1e-5, rtol=1e-5)

    # (2) ragged batch exercising a multi-step grid (tile_b=16, pad 40 -> 48, grid=3)
    x2 = jax.random.normal(kx2, (40, input_dim), jnp.float32)
    d2 = jax.block_until_ready(rainbow_forward(x2, params, action_dim, atom_size, tile_b=16))
    r2 = rainbow_reference(x2, raw, action_dim, atom_size)
    assert d2.shape == (40, action_dim, atom_size)
    assert jnp.allclose(jnp.sum(d2, axis=-1), 1.0, atol=1e-5)
    assert jnp.allclose(d2, r2, atol=1e-5, rtol=1e-5)

    print("KERNEL_OK")
</pallas_src>

<mosaic_0001>
module attributes {stable_mosaic.version = 11 : i64} {
  func.func @rainbow_kernel(%arg0: i32, %arg1: memref<8x16xf32, #tpu.memory_space<vmem>>, %arg2: memref<16x128xf32, #tpu.memory_space<vmem>>, %arg3: memref<1x128xf32, #tpu.memory_space<vmem>>, %arg4: memref<128x256xf32, #tpu.memory_space<vmem>>, %arg5: memref<1x256xf32, #tpu.memory_space<vmem>>, %arg6: memref<128x128xf32, #tpu.memory_space<vmem>>, %arg7: memref<1x128xf32, #tpu.memory_space<vmem>>, %arg8: memref<128x512xf32, #tpu.memory_space<vmem>>, %arg9: memref<1x512xf32, #tpu.memory_space<vmem>>, %arg10: memref<8x512xf32, #tpu.memory_space<vmem>>) attributes {dimension_semantics = [#tpu.dimension_semantics<parallel>], iteration_bounds = array<i64: 1>, scalar_prefetch = 0 : i64, scratch_operands = 0 : i64, tpu.core_type = #tpu.core_type<tc>, window_params = [{transform_indices = @transform_0, window_bounds = array<i64: 8, 16>}, {pipeline_mode = #tpu.pipeline_mode<synchronous>, transform_indices = @transform_1, window_bounds = array<i64: 16, 128>}, {pipeline_mode = #tpu.pipeline_mode<synchronous>, transform_indices = @transform_2, window_bounds = array<i64: 1, 128>}, {pipeline_mode = #tpu.pipeline_mode<synchronous>, transform_indices = @transform_3, window_bounds = array<i64: 128, 256>}, {pipeline_mode = #tpu.pipeline_mode<synchronous>, transform_indices = @transform_4, window_bounds = array<i64: 1, 256>}, {pipeline_mode = #tpu.pipeline_mode<synchronous>, transform_indices = @transform_5, window_bounds = array<i64: 128, 128>}, {pipeline_mode = #tpu.pipeline_mode<synchronous>, transform_indices = @transform_6, window_bounds = array<i64: 1, 128>}, {pipeline_mode = #tpu.pipeline_mode<synchronous>, transform_indices = @transform_7, window_bounds = array<i64: 128, 512>}, {pipeline_mode = #tpu.pipeline_mode<synchronous>, transform_indices = @transform_8, window_bounds = array<i64: 1, 512>}, {transform_indices = @transform_9, window_bounds = array<i64: 8, 512>}]} {
    %c0 = arith.constant 0 : index
    %c0_0 = arith.constant 0 : index
    %0 = vector.load %arg1[%c0, %c0_0] : memref<8x16xf32, #tpu.memory_space<vmem>>, vector<8x16xf32>
    %c0_1 = arith.constant 0 : index
    %c0_2 = arith.constant 0 : index
    %1 = vector.load %arg2[%c0_1, %c0_2] : memref<16x128xf32, #tpu.memory_space<vmem>>, vector<16x128xf32>
    %cst = arith.constant dense<0.000000e+00> : vector<8x128xf32>
    %2 = tpu.matmul %0, %1, %cst {dimension_numbers = #tpu.dot_dimension_numbers<[1], [0], [0], [1], [0, 0, 1, 1], [], []>} : vector<8x16xf32>, vector<16x128xf32>, vector<8x128xf32> -> vector<8x128xf32>
    %c0_3 = arith.constant 0 : index
    %c0_4 = arith.constant 0 : index
    %3 = vector.load %arg3[%c0_3, %c0_4] : memref<1x128xf32, #tpu.memory_space<vmem>>, vector<1x128xf32>
    %4 = vector.broadcast %3 : vector<1x128xf32> to vector<8x128xf32>
    %5 = arith.addf %2, %4 : vector<8x128xf32>
    %cst_5 = arith.constant 0.000000e+00 : f32
    %6 = vector.broadcast %cst_5 : f32 to vector<8x128xf32>
    %7 = arith.maximumf %5, %6 : vector<8x128xf32>
    %c0_6 = arith.constant 0 : index
    %c0_7 = arith.constant 0 : index
    %8 = vector.load %arg4[%c0_6, %c0_7] : memref<128x256xf32, #tpu.memory_space<vmem>>, vector<128x256xf32>
    %cst_8 = arith.constant dense<0.000000e+00> : vector<8x256xf32>
    %9 = tpu.matmul %7, %8, %cst_8 {dimension_numbers = #tpu.dot_dimension_numbers<[1], [0], [0], [1], [0, 0, 1, 1], [], []>} : vector<8x128xf32>, vector<128x256xf32>, vector<8x256xf32> -> vector<8x256xf32>
    %c0_9 = arith.constant 0 : index
    %c0_10 = arith.constant 0 : index
    %10 = vector.load %arg5[%c0_9, %c0_10] : memref<1x256xf32, #tpu.memory_space<vmem>>, vector<1x256xf32>
    %11 = vector.broadcast %10 : vector<1x256xf32> to vector<8x256xf32>
    %12 = arith.addf %9, %11 : vector<8x256xf32>
    %cst_11 = arith.constant 0.000000e+00 : f32
    %13 = vector.broadcast %cst_11 : f32 to vector<8x256xf32>
    %14 = arith.maximumf %12, %13 : vector<8x256xf32>
    %15 = vector.extract_strided_slice %14 {offsets = [0, 0], sizes = [8, 128], strides = [1, 1]} : vector<8x256xf32> to vector<8x128xf32>
    %16 = vector.extract_strided_slice %14 {offsets = [0, 128], sizes = [8, 128], strides = [1, 1]} : vector<8x256xf32> to vector<8x128xf32>
    %c0_12 = arith.constant 0 : index
    %c0_13 = arith.constant 0 : index
    %17 = vector.load %arg6[%c0_12, %c0_13] : memref<128x128xf32, #tpu.memory_space<vmem>>, vector<128x128xf32>
    %cst_14 = arith.constant dense<0.000000e+00> : vector<8x128xf32>
    %18 = tpu.matmul %15, %17, %cst_14 {dimension_numbers = #tpu.dot_dimension_numbers<[1], [0], [0], [1], [0, 0, 1, 1], [], []>} : vector<8x128xf32>, vector<128x128xf32>, vector<8x128xf32> -> vector<8x128xf32>
    %c0_15 = arith.constant 0 : index
    %c0_16 = arith.constant 0 : index
    %19 = vector.load %arg7[%c0_15, %c0_16] : memref<1x128xf32, #tpu.memory_space<vmem>>, vector<1x128xf32>
    %20 = vector.broadcast %19 : vector<1x128xf32> to vector<8x128xf32>
    %21 = arith.addf %18, %20 : vector<8x128xf32>
    %c0_17 = arith.constant 0 : index
    %c0_18 = arith.constant 0 : index
    %22 = vector.load %arg8[%c0_17, %c0_18] : memref<128x512xf32, #tpu.memory_space<vmem>>, vector<128x512xf32>
    %cst_19 = arith.constant dense<0.000000e+00> : vector<8x512xf32>
    %23 = tpu.matmul %16, %22, %cst_19 {dimension_numbers = #tpu.dot_dimension_numbers<[1], [0], [0], [1], [0, 0, 1, 1], [], []>} : vector<8x128xf32>, vector<128x512xf32>, vector<8x512xf32> -> vector<8x512xf32>
    %c0_20 = arith.constant 0 : index
    %c0_21 = arith.constant 0 : index
    %24 = vector.load %arg9[%c0_20, %c0_21] : memref<1x512xf32, #tpu.memory_space<vmem>>, vector<1x512xf32>
    %25 = vector.broadcast %24 : vector<1x512xf32> to vector<8x512xf32>
    %26 = arith.addf %23, %25 : vector<8x512xf32>
    %27 = vector.extract_strided_slice %26 {offsets = [0, 0], sizes = [8, 128], strides = [1, 1]} : vector<8x512xf32> to vector<8x128xf32>
    %28 = vector.extract_strided_slice %26 {offsets = [0, 128], sizes = [8, 128], strides = [1, 1]} : vector<8x512xf32> to vector<8x128xf32>
    %29 = arith.addf %27, %28 : vector<8x128xf32>
    %30 = vector.extract_strided_slice %26 {offsets = [0, 256], sizes = [8, 128], strides = [1, 1]} : vector<8x512xf32> to vector<8x128xf32>
    %31 = arith.addf %29, %30 : vector<8x128xf32>
    %32 = vector.extract_strided_slice %26 {offsets = [0, 384], sizes = [8, 128], strides = [1, 1]} : vector<8x512xf32> to vector<8x128xf32>
    %33 = arith.addf %31, %32 : vector<8x128xf32>
    %cst_22 = arith.constant 2.500000e-01 : f32
    %34 = vector.broadcast %cst_22 : f32 to vector<8x128xf32>
    %35 = arith.mulf %33, %34 : vector<8x128xf32>
    %36 = arith.subf %21, %35 : vector<8x128xf32>
    %37 = vector.extract_strided_slice %26 {offsets = [0, 0], sizes = [8, 128], strides = [1, 1]} : vector<8x512xf32> to vector<8x128xf32>
    %38 = arith.addf %36, %37 : vector<8x128xf32>
    %cst_23 = arith.constant dense<0xFF800000> : vector<8xf32>
    %39 = vector.multi_reduction <maximumf>, %38, %cst_23 [1] : vector<8x128xf32> to vector<8xf32>
    %40 = vector.shape_cast %39 : vector<8xf32> to vector<8x1xf32>
    %41 = vector.broadcast %40 : vector<8x1xf32> to vector<8x128xf32>
    %42 = arith.subf %38, %41 : vector<8x128xf32>
    %43 = math.exp %42 : vector<8x128xf32>
    %cst_24 = arith.constant dense<0.000000e+00> : vector<8xf32>
    %44 = vector.multi_reduction <add>, %43, %cst_24 [1] : vector<8x128xf32> to vector<8xf32>
    %45 = vector.shape_cast %44 : vector<8xf32> to vector<8x1xf32>
    %46 = tpu.reciprocal %45 : vector<8x1xf32> -> vector<8x1xf32>
    %47 = vector.broadcast %46 : vector<8x1xf32> to vector<8x128xf32>
    %48 = arith.mulf %43, %47 : vector<8x128xf32>
    %c0_25 = arith.constant 0 : index
    %c0_26 = arith.constant 0 : index
    %49 = vector.load %arg10[%c0_25, %c0_26] : memref<8x512xf32, #tpu.memory_space<vmem>>, vector<8x128xf32>
    tpu.vector_store %arg10[%c0_25, %c0_26], %48 {strides = array<i32>} : memref<8x512xf32, #tpu.memory_space<vmem>>, vector<8x128xf32>,
    %50 = vector.extract_strided_slice %26 {offsets = [0, 128], sizes = [8, 128], strides = [1, 1]} : vector<8x512xf32> to vector<8x128xf32>
    %51 = arith.addf %36, %50 : vector<8x128xf32>
    %cst_27 = arith.constant dense<0xFF800000> : vector<8xf32>
    %52 = vector.multi_reduction <maximumf>, %51, %cst_27 [1] : vector<8x128xf32> to vector<8xf32>
    %53 = vector.shape_cast %52 : vector<8xf32> to vector<8x1xf32>
    %54 = vector.broadcast %53 : vector<8x1xf32> to vector<8x128xf32>
    %55 = arith.subf %51, %54 : vector<8x128xf32>
    %56 = math.exp %55 : vector<8x128xf32>
    %cst_28 = arith.constant dense<0.000000e+00> : vector<8xf32>
    %57 = vector.multi_reduction <add>, %56, %cst_28 [1] : vector<8x128xf32> to vector<8xf32>
    %58 = vector.shape_cast %57 : vector<8xf32> to vector<8x1xf32>
    %59 = tpu.reciprocal %58 : vector<8x1xf32> -> vector<8x1xf32>
    %60 = vector.broadcast %59 : vector<8x1xf32> to vector<8x128xf32>
    %61 = arith.mulf %56, %60 : vector<8x128xf32>
    %c0_29 = arith.constant 0 : index
    %c128 = arith.constant 128 : index
    %62 = vector.load %arg10[%c0_29, %c128] : memref<8x512xf32, #tpu.memory_space<vmem>>, vector<8x128xf32>
    tpu.vector_store %arg10[%c0_29, %c128], %61 {strides = array<i32>} : memref<8x512xf32, #tpu.memory_space<vmem>>, vector<8x128xf32>,
    %63 = vector.extract_strided_slice %26 {offsets = [0, 256], sizes = [8, 128], strides = [1, 1]} : vector<8x512xf32> to vector<8x128xf32>
    %64 = arith.addf %36, %63 : vector<8x128xf32>
    %cst_30 = arith.constant dense<0xFF800000> : vector<8xf32>
    %65 = vector.multi_reduction <maximumf>, %64, %cst_30 [1] : vector<8x128xf32> to vector<8xf32>
    %66 = vector.shape_cast %65 : vector<8xf32> to vector<8x1xf32>
    %67 = vector.broadcast %66 : vector<8x1xf32> to vector<8x128xf32>
    %68 = arith.subf %64, %67 : vector<8x128xf32>
    %69 = math.exp %68 : vector<8x128xf32>
    %cst_31 = arith.constant dense<0.000000e+00> : vector<8xf32>
    %70 = vector.multi_reduction <add>, %69, %cst_31 [1] : vector<8x128xf32> to vector<8xf32>
    %71 = vector.shape_cast %70 : vector<8xf32> to vector<8x1xf32>
    %72 = tpu.reciprocal %71 : vector<8x1xf32> -> vector<8x1xf32>
    %73 = vector.broadcast %72 : vector<8x1xf32> to vector<8x128xf32>
    %74 = arith.mulf %69, %73 : vector<8x128xf32>
    %c0_32 = arith.constant 0 : index
    %c256 = arith.constant 256 : index
    %75 = vector.load %arg10[%c0_32, %c256] : memref<8x512xf32, #tpu.memory_space<vmem>>, vector<8x128xf32>
    tpu.vector_store %arg10[%c0_32, %c256], %74 {strides = array<i32>} : memref<8x512xf32, #tpu.memory_space<vmem>>, vector<8x128xf32>,
    %76 = vector.extract_strided_slice %26 {offsets = [0, 384], sizes = [8, 128], strides = [1, 1]} : vector<8x512xf32> to vector<8x128xf32>
    %77 = arith.addf %36, %76 : vector<8x128xf32>
    %cst_33 = arith.constant dense<0xFF800000> : vector<8xf32>
    %78 = vector.multi_reduction <maximumf>, %77, %cst_33 [1] : vector<8x128xf32> to vector<8xf32>
    %79 = vector.shape_cast %78 : vector<8xf32> to vector<8x1xf32>
    %80 = vector.broadcast %79 : vector<8x1xf32> to vector<8x128xf32>
    %81 = arith.subf %77, %80 : vector<8x128xf32>
    %82 = math.exp %81 : vector<8x128xf32>
    %cst_34 = arith.constant dense<0.000000e+00> : vector<8xf32>
    %83 = vector.multi_reduction <add>, %82, %cst_34 [1] : vector<8x128xf32> to vector<8xf32>
    %84 = vector.shape_cast %83 : vector<8xf32> to vector<8x1xf32>
    %85 = tpu.reciprocal %84 : vector<8x1xf32> -> vector<8x1xf32>
    %86 = vector.broadcast %85 : vector<8x1xf32> to vector<8x128xf32>
    %87 = arith.mulf %82, %86 : vector<8x128xf32>
    %c0_35 = arith.constant 0 : index
    %c384 = arith.constant 384 : index
    %88 = vector.load %arg10[%c0_35, %c384] : memref<8x512xf32, #tpu.memory_space<vmem>>, vector<8x128xf32>
    tpu.vector_store %arg10[%c0_35, %c384], %87 {strides = array<i32>} : memref<8x512xf32, #tpu.memory_space<vmem>>, vector<8x128xf32>,
    return
  }
  func.func @transform_0(%arg0: i32) -> (i32, i32) {
    %c0_i32 = arith.constant 0 : i32
    %c0_i32_0 = arith.constant 0 : i32
    return %arg0, %c0_i32 : i32, i32
  }
  func.func @transform_1(%arg0: i32) -> (i32, i32) {
    %c0_i32 = arith.constant 0 : i32
    %c0_i32_0 = arith.constant 0 : i32
    %c0_i32_1 = arith.constant 0 : i32
    return %c0_i32, %c0_i32_0 : i32, i32
  }
  func.func @transform_2(%arg0: i32) -> (i32, i32) {
    %c0_i32 = arith.constant 0 : i32
    %c0_i32_0 = arith.constant 0 : i32
    %c0_i32_1 = arith.constant 0 : i32
    return %c0_i32, %c0_i32_0 : i32, i32
  }
  func.func @transform_3(%arg0: i32) -> (i32, i32) {
    %c0_i32 = arith.constant 0 : i32
    %c0_i32_0 = arith.constant 0 : i32
    %c0_i32_1 = arith.constant 0 : i32
    return %c0_i32, %c0_i32_0 : i32, i32
  }
  func.func @transform_4(%arg0: i32) -> (i32, i32) {
    %c0_i32 = arith.constant 0 : i32
    %c0_i32_0 = arith.constant 0 : i32
    %c0_i32_1 = arith.constant 0 : i32
    return %c0_i32, %c0_i32_0 : i32, i32
  }
  func.func @transform_5(%arg0: i32) -> (i32, i32) {
    %c0_i32 = arith.constant 0 : i32
    %c0_i32_0 = arith.constant 0 : i32
    %c0_i32_1 = arith.constant 0 : i32
    return %c0_i32, %c0_i32_0 : i32, i32
  }
  func.func @transform_6(%arg0: i32) -> (i32, i32) {
    %c0_i32 = arith.constant 0 : i32
    %c0_i32_0 = arith.constant 0 : i32
    %c0_i32_1 = arith.constant 0 : i32
    return %c0_i32, %c0_i32_0 : i32, i32
  }
  func.func @transform_7(%arg0: i32) -> (i32, i32) {
    %c0_i32 = arith.constant 0 : i32
    %c0_i32_0 = arith.constant 0 : i32
    %c0_i32_1 = arith.constant 0 : i32
    return %c0_i32, %c0_i32_0 : i32, i32
  }
  func.func @transform_8(%arg0: i32) -> (i32, i32) {
    %c0_i32 = arith.constant 0 : i32
    %c0_i32_0 = arith.constant 0 : i32
    %c0_i32_1 = arith.constant 0 : i32
    return %c0_i32, %c0_i32_0 : i32, i32
  }
  func.func @transform_9(%arg0: i32) -> (i32, i32) {
    %c0_i32 = arith.constant 0 : i32
    %c0_i32_0 = arith.constant 0 : i32
    return %arg0, %c0_i32 : i32, i32
  }
}

</mosaic_0001>

<llo_original>
// kernel: tpu_custom_call.1
$region0: #{tpu_custom_call.1}
  #allocation0 [shape = 'u32[]', space=smem, size = 0x4, offset = 0x4, fixed_abs, tag = 'smem constant byte address 0x4 - core index']
  #allocation1 [shape = 'u32[144,128]{1,0:T(1,128)}', space=vmem, size = 0x12000, scoped, tag = 'internal scratch']
  %s0 = inlined_call_operand.hbm [shape: f32[8,16], index: 0, kind: input, shape index: {}]
  %s1 = inlined_call_operand.hbm [shape: f32[16,128], index: 1, kind: input, shape index: {}]
  %s2 = inlined_call_operand.vmem [shape: f32[1,128], index: 2, kind: input, shape index: {}]
  %s3 = inlined_call_operand.hbm [shape: f32[128,256], index: 3, kind: input, shape index: {}]
  %s4 = inlined_call_operand.vmem [shape: f32[1,256], index: 4, kind: input, shape index: {}]
  %s5 = inlined_call_operand.hbm [shape: f32[128,128], index: 5, kind: input, shape index: {}]
  %s6 = inlined_call_operand.vmem [shape: f32[1,128], index: 6, kind: input, shape index: {}]
  %s7 = inlined_call_operand.hbm [shape: f32[128,512], index: 7, kind: input, shape index: {}]
  %s8 = inlined_call_operand.vmem [shape: f32[1,512], index: 8, kind: input, shape index: {}]
  %s9 = inlined_call_operand.hbm [shape: f32[8,512], index: 9, kind: output, shape index: {}]
  %s10 = sld [smem:[#allocation0]]
  $region66: #{tpu_custom_call.1} parent=0
    _
  %s12 = ssub.s32 1, %s10
  %s13 = scalar_select 0, %s12, %s10
  $region1: #{tpu_custom_call.1} parent=0
    #allocation2 [shape = 'u8[4096]{0}', space=vmem, size = 0x1000, scoped, tag = 'input window, operand 0, single buffered']
    #allocation3 [shape = 's32[1]{0}', space=sflag, size = 0x4, scoped, tag = 'scoped memory for tpu_custom_call.1']
    #allocation4 [shape = 's32[1]{0}', space=sflag, size = 0x4, scoped, tag = 'scoped memory for tpu_custom_call.1']
    #allocation5 [shape = 'u8[8192]{0}', space=vmem, size = 0x2000, scoped, tag = 'input window, operand 1, single buffered']
    #allocation6 [shape = 's32[1]{0}', space=sflag, size = 0x4, scoped, tag = 'scoped memory for tpu_custom_call.1']
    #allocation7 [shape = 'u8[131072]{0}', space=vmem, size = 0x20000, scoped, tag = 'input window, operand 3, single buffered']
    #allocation8 [shape = 'u8[65536]{0}', space=vmem, size = 0x10000, scoped, tag = 'input window, operand 5, single buffered']
    #allocation9 [shape = 's32[1]{0}', space=sflag, size = 0x4, scoped, tag = 'scoped memory for tpu_custom_call.1']
    #allocation10 [shape = 'u8[262144]{0}', space=vmem, size = 0x40000, scoped, tag = 'input window, operand 7, single buffered']
    #allocation11 [shape = 'u8[16384]{0}', space=vmem, size = 0x4000, scoped, tag = 'output window, operand 0, single buffered']
    %14 = vsyncpa [#allocation3], 0
    %15 = vsyncpa [#allocation6], 0
    %16 = vsyncpa [#allocation9], 0
    %17 = vsyncpa [#allocation4], 0
    // Predicated region
    $region2: #{tpu_custom_call.1} parent=1 // pred_check
      _
    $region3: #{tpu_custom_call.1} parent=1 // pred_check_branch
      %19 = sbr.rel (0) target = $region5
    $region4: #{tpu_custom_call.1} parent=1 // pred_region
      %s21 = ssub.s32 128, 128
      %22 = vsyncadd [#allocation3], %s21
      %s24 = sshll.u32 [#allocation2], 4
      %s25 = int_to_ptr.vmem [resolvable:$true] %s24
      %27 = dma.hbm_to_vmem [thread:$0]  %s0, 128, %s25, [#allocation3]
    $region5: #{tpu_custom_call.1} parent=1 // pred_fallthru
      _
    // Predicated region
    $region6: #{tpu_custom_call.1} parent=1 // pred_check
      _
    $region7: #{tpu_custom_call.1} parent=1 // pred_check_branch
      %29 = sbr.rel (0) target = $region9
    $region8: #{tpu_custom_call.1} parent=1 // pred_region
      %s31 = ssub.s32 256, 256
      %32 = vsyncadd [#allocation6], %s31
      %s33 = sshll.u32 [#allocation5], 4
      %s34 = int_to_ptr.vmem [resolvable:$true] %s33
      %39 = dma.hbm_to_vmem [thread:$0]  %s1, 256, %s34, [#allocation6], 128, 128, 8
    $region9: #{tpu_custom_call.1} parent=1 // pred_fallthru
      _
    // Predicated region
    $region10: #{tpu_custom_call.1} parent=1 // pred_check
      _
    $region11: #{tpu_custom_call.1} parent=1 // pred_check_branch
      %41 = sbr.rel (0) target = $region13
    $region12: #{tpu_custom_call.1} parent=1 // pred_region
      _
    $region13: #{tpu_custom_call.1} parent=1 // pred_fallthru
      _
    // Predicated region
    $region14: #{tpu_custom_call.1} parent=1 // pred_check
      _
    $region15: #{tpu_custom_call.1} parent=1 // pred_check_branch
      %43 = sbr.rel (0) target = $region17
    $region16: #{tpu_custom_call.1} parent=1 // pred_region
      %s45 = ssub.s32 4096, 4096
      %46 = vsyncadd [#allocation6], %s45
      %s47 = sshll.u32 [#allocation7], 4
      %s48 = int_to_ptr.vmem [resolvable:$true] %s47
      %53 = dma.hbm_to_vmem [thread:$0]  %s3, 4096, %s48, [#allocation6], 256, 256, 16
    $region17: #{tpu_custom_call.1} parent=1 // pred_fallthru
      _
    // Predicated region
    $region18: #{tpu_custom_call.1} parent=1 // pred_check
      _
    $region19: #{tpu_custom_call.1} parent=1 // pred_check_branch
      %55 = sbr.rel (0) target = $region21
    $region20: #{tpu_custom_call.1} parent=1 // pred_region
      _
    $region21: #{tpu_custom_call.1} parent=1 // pred_fallthru
      _
    // Predicated region
    $region22: #{tpu_custom_call.1} parent=1 // pred_check
      _
    $region23: #{tpu_custom_call.1} parent=1 // pred_check_branch
      %57 = sbr.rel (0) target = $region25
    $region24: #{tpu_custom_call.1} parent=1 // pred_region
      %s59 = ssub.s32 2048, 2048
      %60 = vsyncadd [#allocation9], %s59
      %s61 = sshll.u32 [#allocation8], 4
      %s62 = int_to_ptr.vmem [resolvable:$true] %s61
      %67 = dma.hbm_to_vmem [thread:$0]  %s5, 2048, %s62, [#allocation9], 128, 128, 8
    $region25: #{tpu_custom_call.1} parent=1 // pred_fallthru
      _
    // Predicated region
    $region26: #{tpu_custom_call.1} parent=1 // pred_check
      _
    $region27: #{tpu_custom_call.1} parent=1 // pred_check_branch
      %69 = sbr.rel (0) target = $region29
    $region28: #{tpu_custom_call.1} parent=1 // pred_region
      _
    $region29: #{tpu_custom_call.1} parent=1 // pred_fallthru
      _
    // Predicated region
    $region30: #{tpu_custom_call.1} parent=1 // pred_check
      _
    $region31: #{tpu_custom_call.1} parent=1 // pred_check_branch
      %71 = sbr.rel (0) target = $region33
    $region32: #{tpu_custom_call.1} parent=1 // pred_region
      %s73 = ssub.s32 8192, 8192
      %74 = vsyncadd [#allocation9], %s73
      %s75 = sshll.u32 [#allocation10], 4
      %s76 = int_to_ptr.vmem [resolvable:$true] %s75
      %81 = dma.hbm_to_vmem [thread:$0]  %s7, 8192, %s76, [#allocation9], 512, 512, 32
    $region33: #{tpu_custom_call.1} parent=1 // pred_fallthru
      _
    // Predicated region
    $region34: #{tpu_custom_call.1} parent=1 // pred_check
      _
    $region35: #{tpu_custom_call.1} parent=1 // pred_check_branch
      %83 = sbr.rel (0) target = $region37
    $region36: #{tpu_custom_call.1} parent=1 // pred_region
      _
    $region37: #{tpu_custom_call.1} parent=1 // pred_fallthru
      _
    // Predicated region
    $region38: #{tpu_custom_call.1} parent=1 // pred_check
      _
    $region39: #{tpu_custom_call.1} parent=1 // pred_check_branch
      %85 = sbr.rel (0) target = $region41
    $region40: #{tpu_custom_call.1} parent=1 // pred_region
      %86 = dma.done [#allocation3], 128
    $region41: #{tpu_custom_call.1} parent=1 // pred_fallthru
      _
    // Predicated region
    $region42: #{tpu_custom_call.1} parent=1 // pred_check
      _
    $region43: #{tpu_custom_call.1} parent=1 // pred_check_branch
      %88 = sbr.rel (0) target = $region45
    $region44: #{tpu_custom_call.1} parent=1 // pred_region
      %89 = dma.done [#allocation6], 256
    $region45: #{tpu_custom_call.1} parent=1 // pred_fallthru
      _
    // Predicated region
    $region46: #{tpu_custom_call.1} parent=1 // pred_check
      _
    $region47: #{tpu_custom_call.1} parent=1 // pred_check_branch
      %91 = sbr.rel (0) target = $region49
    $region48: #{tpu_custom_call.1} parent=1 // pred_region
      %92 = dma.done [#allocation6], 4096
    $region49: #{tpu_custom_call.1} parent=1 // pred_fallthru
      _
    // Predicated region
    $region50: #{tpu_custom_call.1} parent=1 // pred_check
      _
    $region51: #{tpu_custom_call.1} parent=1 // pred_check_branch
      %94 = sbr.rel (0) target = $region53
    $region52: #{tpu_custom_call.1} parent=1 // pred_region
      %95 = dma.done [#allocation9], 2048
    $region53: #{tpu_custom_call.1} parent=1 // pred_fallthru
      _
    // Predicated region
    $region54: #{tpu_custom_call.1} parent=1 // pred_check
      _
    $region55: #{tpu_custom_call.1} parent=1 // pred_check_branch
      %97 = sbr.rel (0) target = $region57
    $region56: #{tpu_custom_call.1} parent=1 // pred_region
      %98 = dma.done [#allocation9], 8192
    $region57: #{tpu_custom_call.1} parent=1 // pred_fallthru
      _
    %v99 = vld [vmem:[#allocation2] sm:$0xff]
    %v100 = vld [vmem:[#allocation5] sm:$0xff]
    %v101 = vld [vmem:[#allocation5 + $0x8] sm:$0xff]
    %v102 = vld [vmem:[%s2] sm:$0x1]
    %v104 = vlaneseq
    %v105 = vshrl.u32 %v104, 7
    %v106 = vsub.s32 0, %v105
    %v107 = vrot.slane %v102, %v106
    %vm109 = vcmask 130048
    %v111 = vsel %vm109, %v99, 0
    %113 = vmatprep.subr.mxu0 0.0
    %114 = vmatpush1.msra.mxu0 %v100
    %115 = vmatprep.subr.mxu0 0.0
    %116 = vmatpush1.msra.mxu0 %v101
    %117 = vmatprep.subr.mxu0 0.0
    %118 = vmatpush1.msra.mxu0 0.0
    %119 = vmatprep.subr.mxu0 0.0
    %120 = vmatpush1.msra.mxu0 0.0
    %121 = vmatprep.subr.mxu0 0.0
    %122 = vmatpush1.msra.mxu0 0.0
    %123 = vmatprep.subr.mxu0 0.0
    %124 = vmatpush1.msra.mxu0 0.0
    %125 = vmatprep.subr.mxu0 0.0
    %126 = vmatpush1.msra.mxu0 0.0
    %127 = vmatprep.subr.mxu0 0.0
    %128 = vmatpush1.msra.mxu0 0.0
    %129 = vmatprep.subr.mxu0 0.0
    %130 = vmatpush1.msra.mxu0 0.0
    %131 = vmatprep.subr.mxu0 0.0
    %132 = vmatpush1.msra.mxu0 0.0
    %133 = vmatprep.subr.mxu0 0.0
    %134 = vmatpush1.msra.mxu0 0.0
    %135 = vmatprep.subr.mxu0 0.0
    %136 = vmatpush1.msra.mxu0 0.0
    %137 = vmatprep.subr.mxu0 0.0
    %138 = vmatpush1.msra.mxu0 0.0
    %139 = vmatprep.subr.mxu0 0.0
    %140 = vmatpush1.msra.mxu0 0.0
    %141 = vmatprep.subr.mxu0 0.0
    %142 = vmatpush1.msra.mxu0 0.0
    %143 = vmatprep.subr.mxu0 0.0
    %144 = vmatpush1.msra.mxu0 0.0
    %145 = vmatprep.subr.mxu0 0.0
    %146 = vmatpush1.msra.mxu0 0.0
    %147 = vmatprep.subr.mxu0 0.0
    %148 = vmatpush1.msra.mxu0 0.0
    %149 = vmatprep.subr.mxu0 0.0
    %150 = vmatpush1.msra.mxu0 0.0
    %151 = vmatprep.subr.mxu0 0.0
    %152 = vmatpush1.msra.mxu0 0.0
    %153 = vmatprep.subr.mxu0 0.0
    %154 = vmatpush1.msra.mxu0 0.0
    %155 = vmatprep.subr.mxu0 0.0
    %156 = vmatpush1.msra.mxu0 0.0
    %157 = vmatprep.subr.mxu0 0.0
    %158 = vmatpush1.msra.mxu0 0.0
    %159 = vmatprep.subr.mxu0 0.0
    %160 = vmatpush1.msra.mxu0 0.0
    %161 = vmatprep.subr.mxu0 0.0
    %162 = vmatpush1.msra.mxu0 0.0
    %163 = vmatprep.subr.mxu0 0.0
    %164 = vmatpush1.msra.mxu0 0.0
    %165 = vmatprep.subr.mxu0 0.0
    %166 = vmatpush1.msra.mxu0 0.0
    %167 = vmatprep.subr.mxu0 0.0
    %168 = vmatpush1.msra.mxu0 0.0
    %169 = vmatprep.subr.mxu0 0.0
    %170 = vmatpush1.msra.mxu0 0.0
    %171 = vmatprep.subr.mxu0 0.0
    %172 = vmatpush1.msra.mxu0 0.0
    %173 = vmatprep.subr.mxu0 0.0
    %174 = vmatpush1.msra.mxu0 0.0
    %175 = vmatprep.subr.mxu0 0.0
    %176 = vmatpush1.msra.mxu0 0.0
    %177 = vmatprep.mubr.f32.mxu0 0.0
    %178 = vmatmul.mubr.f32.gmra.mrb[0].mxu0 %v111
    %v179 = vpop.f32.mrb[0].mxu0
    %v180 = vadd.f32 %v107, %v179
    %v181 = vpop.f32.mrb[0].mxu0
    %182 = vdwg.mxu0
    %v183 = vmax.f32 %v180, 0.0
    %v184 = vld [vmem:[#allocation7] sm:$0xff]
    %v185 = vld [vmem:[#allocation7 + $0x8] sm:$0xff]
    %v186 = vld [vmem:[#allocation7 + $0x10] sm:$0xff]
    %v187 = vld [vmem:[#allocation7 + $0x18] sm:$0xff]
    %v188 = vld [vmem:[#allocation7 + $0x20] sm:$0xff]
    %v189 = vld [vmem:[#allocation7 + $0x28] sm:$0xff]
    %v190 = vld [vmem:[#allocation7 + $0x30] sm:$0xff]
    %v191 = vld [vmem:[#allocation7 + $0x38] sm:$0xff]
    %v192 = vld [vmem:[#allocation7 + $0x40] sm:$0xff]
    %v193 = vld [vmem:[#allocation7 + $0x48] sm:$0xff]
    %v194 = vld [vmem:[#allocation7 + $0x50] sm:$0xff]
    %v195 = vld [vmem:[#allocation7 + $0x58] sm:$0xff]
    %v196 = vld [vmem:[#allocation7 + $0x60] sm:$0xff]
    %v197 = vld [vmem:[#allocation7 + $0x68] sm:$0xff]
    %v198 = vld [vmem:[#allocation7 + $0x70] sm:$0xff]
    %v199 = vld [vmem:[#allocation7 + $0x78] sm:$0xff]
    %v200 = vld [vmem:[#allocation7 + $0x80] sm:$0xff]
    %v201 = vld [vmem:[#allocation7 + $0x88] sm:$0xff]
    %v202 = vld [vmem:[#allocation7 + $0x90] sm:$0xff]
    %v203 = vld [vmem:[#allocation7 + $0x98] sm:$0xff]
    %v204 = vld [vmem:[#allocation7 + $0xa0] sm:$0xff]
    %v205 = vld [vmem:[#allocation7 + $0xa8] sm:$0xff]
    %v206 = vld [vmem:[#allocation7 + $0xb0] sm:$0xff]
    %v207 = vld [vmem:[#allocation7 + $0xb8] sm:$0xff]
    %v208 = vld [vmem:[#allocation7 + $0xc0] sm:$0xff]
    %v209 = vld [vmem:[#allocation7 + $0xc8] sm:$0xff]
    %v210 = vld [vmem:[#allocation7 + $0xd0] sm:$0xff]
    %v211 = vld [vmem:[#allocation7 + $0xd8] sm:$0xff]
    %v212 = vld [vmem:[#allocation7 + $0xe0] sm:$0xff]
    %v213 = vld [vmem:[#allocation7 + $0xe8] sm:$0xff]
    %v214 = vld [vmem:[#allocation7 + $0xf0] sm:$0xff]
    %v215 = vld [vmem:[#allocation7 + $0xf8] sm:$0xff]
    %v216 = vld [vmem:[%s4] sm:$0x3]
    %v218 = vlaneseq
    %v219 = vshrl.u32 %v218, 7
    %v220 = vsub.s32 0, %v219
    %v221 = vrot.slane %v216, %v220
    %v222 = vlaneseq
    %v223 = vshrl.u32 %v222, 7
    %v224 = vsub.s32 1, %v223
    %v225 = vrot.slane %v216, %v224
    %228 = vmatprep.subr.mxu0 %v185
    %229 = vmatpush1.msra.mxu0 %v184
    %230 = vmatprep.subr.mxu0 %v187
    %231 = vmatpush1.msra.mxu0 %v186
    %232 = vmatprep.subr.mxu0 %v189
    %233 = vmatpush1.msra.mxu0 %v188
    %234 = vmatprep.subr.mxu0 %v191
    %235 = vmatpush1.msra.mxu0 %v190
    %236 = vmatprep.subr.mxu0 %v193
    %237 = vmatpush1.msra.mxu0 %v192
    %238 = vmatprep.subr.mxu0 %v195
    %239 = vmatpush1.msra.mxu0 %v194
    %240 = vmatprep.subr.mxu0 %v197
    %241 = vmatpush1.msra.mxu0 %v196
    %242 = vmatprep.subr.mxu0 %v199
    %243 = vmatpush1.msra.mxu0 %v198
    %244 = vmatprep.subr.mxu0 %v201
    %245 = vmatpush1.msra.mxu0 %v200
    %246 = vmatprep.subr.mxu0 %v203
    %247 = vmatpush1.msra.mxu0 %v202
    %248 = vmatprep.subr.mxu0 %v205
    %249 = vmatpush1.msra.mxu0 %v204
    %250 = vmatprep.subr.mxu0 %v207
    %251 = vmatpush1.msra.mxu0 %v206
    %252 = vmatprep.subr.mxu0 %v209
    %253 = vmatpush1.msra.mxu0 %v208
    %254 = vmatprep.subr.mxu0 %v211
    %255 = vmatpush1.msra.mxu0 %v210
    %256 = vmatprep.subr.mxu0 %v213
    %257 = vmatpush1.msra.mxu0 %v212
    %258 = vmatprep.subr.mxu0 %v215
    %259 = vmatpush1.msra.mxu0 %v214
    %260 = vmatprep.subr.mxu0 0.0
    %261 = vmatpush1.msra.mxu0 0.0
    %262 = vmatprep.subr.mxu0 0.0
    %263 = vmatpush1.msra.mxu0 0.0
    %264 = vmatprep.subr.mxu0 0.0
    %265 = vmatpush1.msra.mxu0 0.0
    %266 = vmatprep.subr.mxu0 0.0
    %267 = vmatpush1.msra.mxu0 0.0
    %268 = vmatprep.subr.mxu0 0.0
    %269 = vmatpush1.msra.mxu0 0.0
    %270 = vmatprep.subr.mxu0 0.0
    %271 = vmatpush1.msra.mxu0 0.0
    %272 = vmatprep.subr.mxu0 0.0
    %273 = vmatpush1.msra.mxu0 0.0
    %274 = vmatprep.subr.mxu0 0.0
    %275 = vmatpush1.msra.mxu0 0.0
    %276 = vmatprep.subr.mxu0 0.0
    %277 = vmatpush1.msra.mxu0 0.0
    %278 = vmatprep.subr.mxu0 0.0
    %279 = vmatpush1.msra.mxu0 0.0
    %280 = vmatprep.subr.mxu0 0.0
    %281 = vmatpush1.msra.mxu0 0.0
    %282 = vmatprep.subr.mxu0 0.0
    %283 = vmatpush1.msra.mxu0 0.0
    %284 = vmatprep.subr.mxu0 0.0
    %285 = vmatpush1.msra.mxu0 0.0
    %286 = vmatprep.subr.mxu0 0.0
    %287 = vmatpush1.msra.mxu0 0.0
    %288 = vmatprep.subr.mxu0 0.0
    %289 = vmatpush1.msra.mxu0 0.0
    %290 = vmatprep.subr.mxu0 0.0
    %291 = vmatpush1.msra.mxu0 0.0
    %292 = vmatprep.mubr.f32.mxu0 0.0
    %293 = vmatmul.mubr.f32.gmra.mrb[0].mxu0 %v183
    %v294 = vpop.f32.mrb[0].mxu0
    %v295 = vadd.f32 %v221, %v294
    %v296 = vpop.f32.mrb[0].mxu0
    %v297 = vadd.f32 %v225, %v296
    %298 = vdwg.mxu0
    %v299 = vmax.f32 %v295, 0.0
    %v300 = vmax.f32 %v297, 0.0
    %v301 = vld [vmem:[#allocation8] sm:$0xff]
    %v302 = vld [vmem:[#allocation8 + $0x8] sm:$0xff]
    %v303 = vld [vmem:[#allocation8 + $0x10] sm:$0xff]
    %v304 = vld [vmem:[#allocation8 + $0x18] sm:$0xff]
    %v305 = vld [vmem:[#allocation8 + $0x20] sm:$0xff]
    %v306 = vld [vmem:[#allocation8 + $0x28] sm:$0xff]
    %v307 = vld [vmem:[#allocation8 + $0x30] sm:$0xff]
    %v308 = vld [vmem:[#allocation8 + $0x38] sm:$0xff]
    %v309 = vld [vmem:[#allocation8 + $0x40] sm:$0xff]
    %v310 = vld [vmem:[#allocation8 + $0x48] sm:$0xff]
    %v311 = vld [vmem:[#allocation8 + $0x50] sm:$0xff]
    %v312 = vld [vmem:[#allocation8 + $0x58] sm:$0xff]
    %v313 = vld [vmem:[#allocation8 + $0x60] sm:$0xff]
    %v314 = vld [vmem:[#allocation8 + $0x68] sm:$0xff]
    %v315 = vld [vmem:[#allocation8 + $0x70] sm:$0xff]
    %v316 = vld [vmem:[#allocation8 + $0x78] sm:$0xff]
    %v317 = vld [vmem:[%s6] sm:$0x1]
    %v319 = vlaneseq
    %v320 = vshrl.u32 %v319, 7
    %v321 = vsub.s32 0, %v320
    %v322 = vrot.slane %v317, %v321
    %324 = vmatprep.subr.mxu0 0.0
    %325 = vmatpush1.msra.mxu0 %v301
    %326 = vmatprep.subr.mxu0 0.0
    %327 = vmatpush1.msra.mxu0 %v302
    %328 = vmatprep.subr.mxu0 0.0
    %329 = vmatpush1.msra.mxu0 %v303
    %330 = vmatprep.subr.mxu0 0.0
    %331 = vmatpush1.msra.mxu0 %v304
    %332 = vmatprep.subr.mxu0 0.0
    %333 = vmatpush1.msra.mxu0 %v305
    %334 = vmatprep.subr.mxu0 0.0
    %335 = vmatpush1.msra.mxu0 %v306
    %336 = vmatprep.subr.mxu0 0.0
    %337 = vmatpush1.msra.mxu0 %v307
    %338 = vmatprep.subr.mxu0 0.0
    %339 = vmatpush1.msra.mxu0 %v308
    %340 = vmatprep.subr.mxu0 0.0
    %341 = vmatpush1.msra.mxu0 %v309
    %342 = vmatprep.subr.mxu0 0.0
    %343 = vmatpush1.msra.mxu0 %v310
    %344 = vmatprep.subr.mxu0 0.0
    %345 = vmatpush1.msra.mxu0 %v311
    %346 = vmatprep.subr.mxu0 0.0
    %347 = vmatpush1.msra.mxu0 %v312
    %348 = vmatprep.subr.mxu0 0.0
    %349 = vmatpush1.msra.mxu0 %v313
    %350 = vmatprep.subr.mxu0 0.0
    %351 = vmatpush1.msra.mxu0 %v314
    %352 = vmatprep.subr.mxu0 0.0
    %353 = vmatpush1.msra.mxu0 %v315
    %354 = vmatprep.subr.mxu0 0.0
    %355 = vmatpush1.msra.mxu0 %v316
    %356 = vmatprep.subr.mxu0 0.0
    %357 = vmatpush1.msra.mxu0 0.0
    %358 = vmatprep.subr.mxu0 0.0
    %359 = vmatpush1.msra.mxu0 0.0
    %360 = vmatprep.subr.mxu0 0.0
    %361 = vmatpush1.msra.mxu0 0.0
    %362 = vmatprep.subr.mxu0 0.0
    %363 = vmatpush1.msra.mxu0 0.0
    %364 = vmatprep.subr.mxu0 0.0
    %365 = vmatpush1.msra.mxu0 0.0
    %366 = vmatprep.subr.mxu0 0.0
    %367 = vmatpush1.msra.mxu0 0.0
    %368 = vmatprep.subr.mxu0 0.0
    %369 = vmatpush1.msra.mxu0 0.0
    %370 = vmatprep.subr.mxu0 0.0
    %371 = vmatpush1.msra.mxu0 0.0
    %372 = vmatprep.subr.mxu0 0.0
    %373 = vmatpush1.msra.mxu0 0.0
    %374 = vmatprep.subr.mxu0 0.0
    %375 = vmatpush1.msra.mxu0 0.0
    %376 = vmatprep.subr.mxu0 0.0
    %377 = vmatpush1.msra.mxu0 0.0
    %378 = vmatprep.subr.mxu0 0.0
    %379 = vmatpush1.msra.mxu0 0.0
    %380 = vmatprep.subr.mxu0 0.0
    %381 = vmatpush1.msra.mxu0 0.0
    %382 = vmatprep.subr.mxu0 0.0
    %383 = vmatpush1.msra.mxu0 0.0
    %384 = vmatprep.subr.mxu0 0.0
    %385 = vmatpush1.msra.mxu0 0.0
    %386 = vmatprep.subr.mxu0 0.0
    %387 = vmatpush1.msra.mxu0 0.0
    %388 = vmatprep.mubr.f32.mxu0 0.0
    %389 = vmatmul.mubr.f32.gmra.mrb[0].mxu0 %v299
    %v390 = vpop.f32.mrb[0].mxu0
    %v391 = vadd.f32 %v322, %v390
    %v392 = vpop.f32.mrb[0].mxu0
    %393 = vdwg.mxu0
    %v394 = vld [vmem:[#allocation10] sm:$0xff]
    %v395 = vld [vmem:[#allocation10 + $0x8] sm:$0xff]
    %v396 = vld [vmem:[#allocation10 + $0x10] sm:$0xff]
    %v397 = vld [vmem:[#allocation10 + $0x18] sm:$0xff]
    %v398 = vld [vmem:[#allocation10 + $0x20] sm:$0xff]
    %v399 = vld [vmem:[#allocation10 + $0x28] sm:$0xff]
    %v400 = vld [vmem:[#allocation10 + $0x30] sm:$0xff]
    %v401 = vld [vmem:[#allocation10 + $0x38] sm:$0xff]
    %v402 = vld [vmem:[#allocation10 + $0x40] sm:$0xff]
    %v403 = vld [vmem:[#allocation10 + $0x48] sm:$0xff]
    %v404 = vld [vmem:[#allocation10 + $0x50] sm:$0xff]
    %v405 = vld [vmem:[#allocation10 + $0x58] sm:$0xff]
    %v406 = vld [vmem:[#allocation10 + $0x60] sm:$0xff]
    %v407 = vld [vmem:[#allocation10 + $0x68] sm:$0xff]
    %v408 = vld [vmem:[#allocation10 + $0x70] sm:$0xff]
    %v409 = vld [vmem:[#allocation10 + $0x78] sm:$0xff]
    %v410 = vld [vmem:[#allocation10 + $0x80] sm:$0xff]
    %v411 = vld [vmem:[#allocation10 + $0x88] sm:$0xff]
    %v412 = vld [vmem:[#allocation10 + $0x90] sm:$0xff]
    %v413 = vld [vmem:[#allocation10 + $0x98] sm:$0xff]
    %v414 = vld [vmem:[#allocation10 + $0xa0] sm:$0xff]
    %v415 = vld [vmem:[#allocation10 + $0xa8] sm:$0xff]
    %v416 = vld [vmem:[#allocation10 + $0xb0] sm:$0xff]
    %v417 = vld [vmem:[#allocation10 + $0xb8] sm:$0xff]
    %v418 = vld [vmem:[#allocation10 + $0xc0] sm:$0xff]
    %v419 = vld [vmem:[#allocation10 + $0xc8] sm:$0xff]
    %v420 = vld [vmem:[#allocation10 + $0xd0] sm:$0xff]
    %v421 = vld [vmem:[#allocation10 + $0xd8] sm:$0xff]
    %v422 = vld [vmem:[#allocation10 + $0xe0] sm:$0xff]
    %v423 = vld [vmem:[#allocation10 + $0xe8] sm:$0xff]
    %v424 = vld [vmem:[#allocation10 + $0xf0] sm:$0xff]
    %v425 = vld [vmem:[#allocation10 + $0xf8] sm:$0xff]
    %v426 = vld [vmem:[#allocation10 + $0x100] sm:$0xff]
    %v427 = vld [vmem:[#allocation10 + $0x108] sm:$0xff]
    %v428 = vld [vmem:[#allocation10 + $0x110] sm:$0xff]
    %v429 = vld [vmem:[#allocation10 + $0x118] sm:$0xff]
    %v430 = vld [vmem:[#allocation10 + $0x120] sm:$0xff]
    %v431 = vld [vmem:[#allocation10 + $0x128] sm:$0xff]
    %v432 = vld [vmem:[#allocation10 + $0x130] sm:$0xff]
    %v433 = vld [vmem:[#allocation10 + $0x138] sm:$0xff]
    %v434 = vld [vmem:[#allocation10 + $0x140] sm:$0xff]
    %v435 = vld [vmem:[#allocation10 + $0x148] sm:$0xff]
    %v436 = vld [vmem:[#allocation10 + $0x150] sm:$0xff]
    %v437 = vld [vmem:[#allocation10 + $0x158] sm:$0xff]
    %v438 = vld [vmem:[#allocation10 + $0x160] sm:$0xff]
    %v439 = vld [vmem:[#allocation10 + $0x168] sm:$0xff]
    %v440 = vld [vmem:[#allocation10 + $0x170] sm:$0xff]
    %v441 = vld [vmem:[#allocation10 + $0x178] sm:$0xff]
    %v442 = vld [vmem:[#allocation10 + $0x180] sm:$0xff]
    %v443 = vld [vmem:[#allocation10 + $0x188] sm:$0xff]
    %v444 = vld [vmem:[#allocation10 + $0x190] sm:$0xff]
    %v445 = vld [vmem:[#allocation10 + $0x198] sm:$0xff]
    %v446 = vld [vmem:[#allocation10 + $0x1a0] sm:$0xff]
    %v447 = vld [vmem:[#allocation10 + $0x1a8] sm:$0xff]
    %v448 = vld [vmem:[#allocation10 + $0x1b0] sm:$0xff]
    %v449 = vld [vmem:[#allocation10 + $0x1b8] sm:$0xff]
    %v450 = vld [vmem:[#allocation10 + $0x1c0] sm:$0xff]
    %v451 = vld [vmem:[#allocation10 + $0x1c8] sm:$0xff]
    %v452 = vld [vmem:[#allocation10 + $0x1d0] sm:$0xff]
    %v453 = vld [vmem:[#allocation10 + $0x1d8] sm:$0xff]
    %v454 = vld [vmem:[#allocation10 + $0x1e0] sm:$0xff]
    %v455 = vld [vmem:[#allocation10 + $0x1e8] sm:$0xff]
    %v456 = vld [vmem:[#allocation10 + $0x1f0] sm:$0xff]
    %v457 = vld [vmem:[#allocation10 + $0x1f8] sm:$0xff]
    %v458 = vld [vmem:[%s8] sm:$0xf]
    %v460 = vlaneseq
    %v461 = vshrl.u32 %v460, 7
    %v462 = vsub.s32 0, %v461
    %v463 = vrot.slane %v458, %v462
    %v464 = vlaneseq
    %v465 = vshrl.u32 %v464, 7
    %v466 = vsub.s32 1, %v465
    %v467 = vrot.slane %v458, %v466
    %v468 = vlaneseq
    %v469 = vshrl.u32 %v468, 7
    %v470 = vsub.s32 2, %v469
    %v471 = vrot.slane %v458, %v470
    %v472 = vlaneseq
    %v473 = vshrl.u32 %v472, 7
    %v474 = vsub.s32 3, %v473
    %v475 = vrot.slane %v458, %v474
    %480 = vmatprep.subr.mxu0 %v395
    %481 = vmatpush1.msra.mxu0 %v394
    %482 = vmatprep.subr.mxu0 %v399
    %483 = vmatpush1.msra.mxu0 %v398
    %484 = vmatprep.subr.mxu0 %v403
    %485 = vmatpush1.msra.mxu0 %v402
    %486 = vmatprep.subr.mxu0 %v407
    %487 = vmatpush1.msra.mxu0 %v406
    %488 = vmatprep.subr.mxu0 %v411
    %489 = vmatpush1.msra.mxu0 %v410
    %490 = vmatprep.subr.mxu0 %v415
    %491 = vmatpush1.msra.mxu0 %v414
    %492 = vmatprep.subr.mxu0 %v419
    %493 = vmatpush1.msra.mxu0 %v418
    %494 = vmatprep.subr.mxu0 %v423
    %495 = vmatpush1.msra.mxu0 %v422
    %496 = vmatprep.subr.mxu0 %v427
    %497 = vmatpush1.msra.mxu0 %v426
    %498 = vmatprep.subr.mxu0 %v431
    %499 = vmatpush1.msra.mxu0 %v430
    %500 = vmatprep.subr.mxu0 %v435
    %501 = vmatpush1.msra.mxu0 %v434
    %502 = vmatprep.subr.mxu0 %v439
    %503 = vmatpush1.msra.mxu0 %v438
    %504 = vmatprep.subr.mxu0 %v443
    %505 = vmatpush1.msra.mxu0 %v442
    %506 = vmatprep.subr.mxu0 %v447
    %507 = vmatpush1.msra.mxu0 %v446
    %508 = vmatprep.subr.mxu0 %v451
    %509 = vmatpush1.msra.mxu0 %v450
    %510 = vmatprep.subr.mxu0 %v455
    %511 = vmatpush1.msra.mxu0 %v454
    %512 = vmatprep.subr.mxu0 0.0
    %513 = vmatpush1.msra.mxu0 0.0
    %514 = vmatprep.subr.mxu0 0.0
    %515 = vmatpush1.msra.mxu0 0.0
    %516 = vmatprep.subr.mxu0 0.0
    %517 = vmatpush1.msra.mxu0 0.0
    %518 = vmatprep.subr.mxu0 0.0
    %519 = vmatpush1.msra.mxu0 0.0
    %520 = vmatprep.subr.mxu0 0.0
    %521 = vmatpush1.msra.mxu0 0.0
    %522 = vmatprep.subr.mxu0 0.0
    %523 = vmatpush1.msra.mxu0 0.0
    %524 = vmatprep.subr.mxu0 0.0
    %525 = vmatpush1.msra.mxu0 0.0
    %526 = vmatprep.subr.mxu0 0.0
    %527 = vmatpush1.msra.mxu0 0.0
    %528 = vmatprep.subr.mxu0 0.0
    %529 = vmatpush1.msra.mxu0 0.0
    %530 = vmatprep.subr.mxu0 0.0
    %531 = vmatpush1.msra.mxu0 0.0
    %532 = vmatprep.subr.mxu0 0.0
    %533 = vmatpush1.msra.mxu0 0.0
    %534 = vmatprep.subr.mxu0 0.0
    %535 = vmatpush1.msra.mxu0 0.0
    %536 = vmatprep.subr.mxu0 0.0
    %537 = vmatpush1.msra.mxu0 0.0
    %538 = vmatprep.subr.mxu0 0.0
    %539 = vmatpush1.msra.mxu0 0.0
    %540 = vmatprep.subr.mxu0 0.0
    %541 = vmatpush1.msra.mxu0 0.0
    %542 = vmatprep.subr.mxu0 0.0
    %543 = vmatpush1.msra.mxu0 0.0
    %544 = vmatprep.mubr.f32.mxu0 0.0
    %545 = vmatmul.mubr.f32.gmra.mrb[0].mxu0 %v300
    %v546 = vpop.f32.mrb[0].mxu0
    %v547 = vadd.f32 %v463, %v546
    %v548 = vpop.f32.mrb[0].mxu0
    %v549 = vadd.f32 %v467, %v548
    %550 = vdwg.mxu0
    %551 = vmatprep.subr.mxu0 %v397
    %552 = vmatpush1.msra.mxu0 %v396
    %553 = vmatprep.subr.mxu0 %v401
    %554 = vmatpush1.msra.mxu0 %v400
    %555 = vmatprep.subr.mxu0 %v405
    %556 = vmatpush1.msra.mxu0 %v404
    %557 = vmatprep.subr.mxu0 %v409
    %558 = vmatpush1.msra.mxu0 %v408
    %559 = vmatprep.subr.mxu0 %v413
    %560 = vmatpush1.msra.mxu0 %v412
    %561 = vmatprep.subr.mxu0 %v417
    %562 = vmatpush1.msra.mxu0 %v416
    %563 = vmatprep.subr.mxu0 %v421
    %564 = vmatpush1.msra.mxu0 %v420
    %565 = vmatprep.subr.mxu0 %v425
    %566 = vmatpush1.msra.mxu0 %v424
    %567 = vmatprep.subr.mxu0 %v429
    %568 = vmatpush1.msra.mxu0 %v428
    %569 = vmatprep.subr.mxu0 %v433
    %570 = vmatpush1.msra.mxu0 %v432
    %571 = vmatprep.subr.mxu0 %v437
    %572 = vmatpush1.msra.mxu0 %v436
    %573 = vmatprep.subr.mxu0 %v441
    %574 = vmatpush1.msra.mxu0 %v440
    %575 = vmatprep.subr.mxu0 %v445
    %576 = vmatpush1.msra.mxu0 %v444
    %577 = vmatprep.subr.mxu0 %v449
    %578 = vmatpush1.msra.mxu0 %v448
    %579 = vmatprep.subr.mxu0 %v453
    %580 = vmatpush1.msra.mxu0 %v452
    %581 = vmatprep.subr.mxu0 %v457
    %582 = vmatpush1.msra.mxu0 %v456
    %583 = vmatprep.subr.mxu0 0.0
    %584 = vmatpush1.msra.mxu0 0.0
    %585 = vmatprep.subr.mxu0 0.0
    %586 = vmatpush1.msra.mxu0 0.0
    %587 = vmatprep.subr.mxu0 0.0
    %588 = vmatpush1.msra.mxu0 0.0
    %589 = vmatprep.subr.mxu0 0.0
    %590 = vmatpush1.msra.mxu0 0.0
    %591 = vmatprep.subr.mxu0 0.0
    %592 = vmatpush1.msra.mxu0 0.0
    %593 = vmatprep.subr.mxu0 0.0
    %594 = vmatpush1.msra.mxu0 0.0
    %595 = vmatprep.subr.mxu0 0.0
    %596 = vmatpush1.msra.mxu0 0.0
    %597 = vmatprep.subr.mxu0 0.0
    %598 = vmatpush1.msra.mxu0 0.0
    %599 = vmatprep.subr.mxu0 0.0
    %600 = vmatpush1.msra.mxu0 0.0
    %601 = vmatprep.subr.mxu0 0.0
    %602 = vmatpush1.msra.mxu0 0.0
    %603 = vmatprep.subr.mxu0 0.0
    %604 = vmatpush1.msra.mxu0 0.0
    %605 = vmatprep.subr.mxu0 0.0
    %606 = vmatpush1.msra.mxu0 0.0
    %607 = vmatprep.subr.mxu0 0.0
    %608 = vmatpush1.msra.mxu0 0.0
    %609 = vmatprep.subr.mxu0 0.0
    %610 = vmatpush1.msra.mxu0 0.0
    %611 = vmatprep.subr.mxu0 0.0
    %612 = vmatpush1.msra.mxu0 0.0
    %613 = vmatprep.subr.mxu0 0.0
    %614 = vmatpush1.msra.mxu0 0.0
    %615 = vmatprep.mubr.f32.mxu0 0.0
    %616 = vmatmul.mubr.f32.gmra.mrb[0].mxu0 %v300
    %v617 = vpop.f32.mrb[0].mxu0
    %v618 = vadd.f32 %v471, %v617
    %v619 = vpop.f32.mrb[0].mxu0
    %v620 = vadd.f32 %v475, %v619
    %621 = vdwg.mxu0
    %v622 = vadd.f32 %v547, %v549
    %v623 = vadd.f32 %v622, %v618
    %v624 = vadd.f32 %v623, %v620
    %v625 = vmul.f32 %v624, 0.25
    %v626 = vsub.f32 %v391, %v625
    %v627 = vadd.f32 %v626, %v547
    %628 = vmax.xlane.f32.xlu0 %v627
    %v629 = vpop.xlane.xlu0 %628
    %v630 = vsub.f32 %v627, %v629
    %v631 = vmul.f32 %v630, 1.442695
    %v632 = vpow.pop %v631
    %633 = vadd.xlane.f32.xlu0 %v632
    %v634 = vpop.xlane.xlu0 %633
    %v635 = vrcp.pop %v634
    %v636 = vmul.f32 %v632, %v635
    %637 = vst [vmem:[#allocation11] sm:$0xff] %v636
    %v638 = vadd.f32 %v626, %v549
    %639 = vmax.xlane.f32.xlu0 %v638
    %v640 = vpop.xlane.xlu0 %639
    %v641 = vsub.f32 %v638, %v640
    %v642 = vmul.f32 %v641, 1.442695
    %v643 = vpow.pop %v642
    %644 = vadd.xlane.f32.xlu0 %v643
    %v645 = vpop.xlane.xlu0 %644
    %v646 = vrcp.pop %v645
    %v647 = vmul.f32 %v643, %v646
    %648 = vst [vmem:[#allocation11 + $0x8] sm:$0xff] %v647
    %v649 = vadd.f32 %v626, %v618
    %650 = vmax.xlane.f32.xlu0 %v649
    %v651 = vpop.xlane.xlu0 %650
    %v652 = vsub.f32 %v649, %v651
    %v653 = vmul.f32 %v652, 1.442695
    %v654 = vpow.pop %v653
    %655 = vadd.xlane.f32.xlu0 %v654
    %v656 = vpop.xlane.xlu0 %655
    %v657 = vrcp.pop %v656
    %v658 = vmul.f32 %v654, %v657
    %659 = vst [vmem:[#allocation11 + $0x10] sm:$0xff] %v658
    %v660 = vadd.f32 %v626, %v620
    %661 = vmax.xlane.f32.xlu0 %v660
    %v662 = vpop.xlane.xlu0 %661
    %v663 = vsub.f32 %v660, %v662
    %v664 = vmul.f32 %v663, 1.442695
    %v665 = vpow.pop %v664
    %666 = vadd.xlane.f32.xlu0 %v665
    %v667 = vpop.xlane.xlu0 %666
    %v668 = vrcp.pop %v667
    %v669 = vmul.f32 %v665, %v668
    %670 = vst [vmem:[#allocation11 + $0x18] sm:$0xff] %v669
    // Predicated region
    $region58: #{tpu_custom_call.1} parent=1 // pred_check
      _
    $region59: #{tpu_custom_call.1} parent=1 // pred_check_branch
      %672 = sbr.rel (0) target = $region61
    $region60: #{tpu_custom_call.1} parent=1 // pred_region
      %s674 = ssub.s32 512, 512
      %675 = vsyncadd [#allocation4], %s674
      %s677 = sshll.u32 [#allocation11], 4
      %s678 = int_to_ptr.vmem [resolvable:$true] %s677
      %680 = dma.vmem_to_hbm [thread:$0]  %s678, 512, %s9, [#allocation4]
    $region61: #{tpu_custom_call.1} parent=1 // pred_fallthru
      _
    // Predicated region
    $region62: #{tpu_custom_call.1} parent=1 // pred_check
      _
    $region63: #{tpu_custom_call.1} parent=1 // pred_check_branch
      %682 = sbr.rel (0) target = $region65
    $region64: #{tpu_custom_call.1} parent=1 // pred_region
      %683 = dma.done [#allocation4], 512
    $region65: #{tpu_custom_call.1} parent=1 // pred_fallthru
      _
    %684 = vsyncpa [#allocation3], 1
    %685 = vsyncpa [#allocation6], 1
    %686 = vsyncpa [#allocation9], 1
    %687 = vsyncpa [#allocation4], 1

</llo_original>
